<compile_context>
chip_gen: v6e
topology: v6e:2x2x1
jax: 0.10.0
libtpu: 0.0.40
codegen_flags: <defaults>
</compile_context>

<pallas_src>
import functools

import jax
import jax.numpy as jnp
import numpy as np
from jax.experimental import pallas as pl
from jax.experimental.pallas import tpu as pltpu


def time_reasoning_kernel(v_ref, q_ref, mask_ref,
                          whT_ref, bh_ref, wpbT_ref, bpb_ref,
                          out_ref):
    # Block shapes: v (TB, N, H), q (TB, M), mask (TB, N), whT (M, H), bh (1, M),
    #               wpbT (2, M), bpb (2, 1), out (TB, 2, N).
    TB = q_ref.shape[0]

    q = q_ref[...]              # (TB, M)
    mask = mask_ref[...]        # (TB, N)   lane-dense (N on lanes)
    whT = whT_ref[...]          # (M, H)    Wh pre-transposed
    bh = bh_ref[...]            # (1, M)
    wpbT = wpbT_ref[...]        # (2, M)    row 0 = wp, row 1 = wb
    bpb = bpb_ref[...]          # (2, 1)    [bp; bb]

    # Fused per-batch "query-folded" head weights, both heads batched on the sublane axis:
    #   rows [0, TB)     -> posterior head : q[b] ⊙ wp
    #   rows [TB, 2*TB)  -> back head      : q[b] ⊙ wb
    qw = jnp.concatenate([q * wpbT[0:1, :], q * wpbT[1:2, :]], axis=0)        # (2TB, M)

    # Effective weight rows: w_eff[r, h] = Σ_m qw[r, m] * Wh[h, m]            (one MXU matmul)
    w_eff = jnp.dot(qw, whT, preferred_element_type=jnp.float32)              # (2TB, H)

    # Effective bias: b_eff[r] = Σ_m qw[r, m] * bh[m]  + head bias            (hoisted, once per step)
    b_eff = jnp.sum(qw * bh, axis=1, keepdims=True)                           # (2TB, 1)
    b_eff = b_eff + jnp.concatenate(
        [jnp.broadcast_to(bpb[0:1, :], (TB, 1)),
         jnp.broadcast_to(bpb[1:2, :], (TB, 1))], axis=0)                     # (2TB, 1)

    neg = jnp.float32(-100000.0)
    for b in range(TB):  # TB is small and static; unrolled
        v_b = v_ref[b]                                                        # (N, H)
        w_b = jnp.concatenate([w_eff[b:b + 1, :],
                               w_eff[TB + b:TB + b + 1, :]], axis=0)          # (2, H)
        bias_b = jnp.concatenate([b_eff[b:b + 1, :],
                                  b_eff[TB + b:TB + b + 1, :]], axis=0)       # (2, 1)
        # logits[t, n] = Σ_h w_b[t, h] * v_b[n, h]   -> lane-dense (2, N), N on lanes
        logits = jax.lax.dot_general(
            w_b, v_b, (((1,), (1,)), ((), ())),
            preferred_element_type=jnp.float32) + bias_b                      # (2, N)
        m_b = mask[b:b + 1, :]                                                # (1, N)
        out_ref[b] = jnp.where(m_b == 0.0, neg, logits)                       # masked fill


def _pick_batch_tile(B):
    if B <= 8:
        return B
    for cand in (64, 32, 16, 8):          # multiple-of-8 sublane tiles when sub-batching
        if B % cand == 0:
            return cand
    return B


def time_reasoning_cell(q, v, v_mask, params, *, tb=None):
    """q: (B, mid), v: (B, N, hidden), v_mask: (B, N) float {0,1}."""
    B, N, H = v.shape
    M = q.shape[1]
    TB = _pick_batch_tile(B) if tb is None else tb
    assert B % TB == 0

    v_f = v.astype(jnp.float32)
    q_f = q.astype(jnp.float32)                              # (B, M)
    mask_f = v_mask.reshape(B, N).astype(jnp.float32)        # (B, N)  lane-dense
    whT = params["wh"].T.astype(jnp.float32)                 # (M, H)
    bh = params["bh"].reshape(1, M).astype(jnp.float32)      # (1, M)
    wpbT = jnp.concatenate([params["wp"].T, params["wb"].T], axis=0).astype(jnp.float32)   # (2, M)
    bpb = jnp.concatenate([params["bp"], params["bb"]]).reshape(2, 1).astype(jnp.float32)  # (2, 1)

    flops = int(2 * B * (2 * M * H + 2 * N * H) + 6 * B * M + 4 * B * N)
    bytes_accessed = int(4 * (B * N * H + B * M + B * N + M * H + 3 * M + 2 + 2 * B * N))

    out = pl.pallas_call(
        time_reasoning_kernel,
        out_shape=jax.ShapeDtypeStruct((B, 2, N), jnp.float32),
        grid=(B // TB,),
        in_specs=[
            pl.BlockSpec((TB, N, H), lambda i: (i, 0, 0)),   # v
            pl.BlockSpec((TB, M), lambda i: (i, 0)),         # q
            pl.BlockSpec((TB, N), lambda i: (i, 0)),         # v_mask (lane-dense)
            pl.BlockSpec((M, H), lambda i: (0, 0)),          # Wh^T  (shared)
            pl.BlockSpec((1, M), lambda i: (0, 0)),          # b_h
            pl.BlockSpec((2, M), lambda i: (0, 0)),          # [wp; wb]^T (fused heads)
            pl.BlockSpec((2, 1), lambda i: (0, 0)),          # [bp; bb]
        ],
        out_specs=pl.BlockSpec((TB, 2, N), lambda i: (i, 0, 0)),
        compiler_params=pltpu.CompilerParams(dimension_semantics=("parallel",)),
        cost_estimate=pl.CostEstimate(flops=flops, transcendentals=0,
                                      bytes_accessed=bytes_accessed),
    )(v_f, q_f, mask_f, whT, bh, wpbT, bpb)

    return {
        "hidden_pre": v,                        # pass-through, as in the PyTorch module
        "z_logits": out[:, 0, :],               # logits of GumbelCategorical 'z'
        "z_back_logits": out[:, 1, :],          # logits of GumbelCategorical 'z_back'
    }


def reference_forward(q, v, v_mask, params):
    h_to_q = jnp.einsum("bnh,hm->bnm", v, params["wh"]) + params["bh"]
    hidden_now = h_to_q * q[:, None, :]
    lp = jnp.einsum("bnm,mo->bno", hidden_now, params["wp"])[..., 0] + params["bp"]
    lb = jnp.einsum("bnm,mo->bno", hidden_now, params["wb"])[..., 0] + params["bb"]
    lp = jnp.where(v_mask == 0.0, -100000.0, lp)
    lb = jnp.where(v_mask == 0.0, -100000.0, lb)
    return lp, lb


def init_params(key, hidden_size, mid_size):
    k = jax.random.split(key, 6)
    s_h = 1.0 / np.sqrt(hidden_size)
    s_m = 1.0 / np.sqrt(mid_size)
    return {
        "wh": (jax.random.normal(k[0], (hidden_size, mid_size), jnp.float32) * s_h),
        "bh": (jax.random.normal(k[1], (mid_size,), jnp.float32) * s_h),
        "wp": (jax.random.normal(k[2], (mid_size, 1), jnp.float32) * s_m),
        "bp": (jax.random.normal(k[3], (1,), jnp.float32) * s_m),
        "wb": (jax.random.normal(k[4], (mid_size, 1), jnp.float32) * s_m),
        "bb": (jax.random.normal(k[5], (1,), jnp.float32) * s_m),
    }


if __name__ == "__main__":
    B, N, HIDDEN, MID = 2, 8, 32, 16   # batch, num_obj, hidden_size (=v_dim), mid_size (=q_dim)

    root = jax.random.PRNGKey(0)
    kp, kv, kq, km = jax.random.split(root, 4)

    params = init_params(kp, HIDDEN, MID)
    v = jax.random.normal(kv, (B, N, HIDDEN), jnp.float32)
    q = jax.random.normal(kq, (B, MID), jnp.float32)
    v_mask = (jax.random.uniform(km, (B, N)) > 0.3).astype(jnp.float32)

    out = time_reasoning_cell(q, v, v_mask, params)
    jax.block_until_ready(out)

    lp_ref, lb_ref = reference_forward(q, v, v_mask, params)
    assert np.allclose(np.asarray(out["z_logits"]), np.asarray(lp_ref), atol=1e-4, rtol=1e-4)
    assert np.allclose(np.asarray(out["z_back_logits"]), np.asarray(lb_ref), atol=1e-4, rtol=1e-4)
    assert np.allclose(np.asarray(out["hidden_pre"]), np.asarray(v))

    print("KERNEL_OK")
</pallas_src>

<mosaic_0001>
module attributes {stable_mosaic.version = 11 : i64} {
  func.func @time_reasoning_kernel(%arg0: i32, %arg1: memref<2x8x32xf32, #tpu.memory_space<vmem>>, %arg2: memref<2x16xf32, #tpu.memory_space<vmem>>, %arg3: memref<2x8xf32, #tpu.memory_space<vmem>>, %arg4: memref<16x32xf32, #tpu.memory_space<vmem>>, %arg5: memref<1x16xf32, #tpu.memory_space<vmem>>, %arg6: memref<2x16xf32, #tpu.memory_space<vmem>>, %arg7: memref<2x1xf32, #tpu.memory_space<vmem>>, %arg8: memref<2x2x8xf32, #tpu.memory_space<vmem>>) attributes {dimension_semantics = [#tpu.dimension_semantics<parallel>], iteration_bounds = array<i64: 1>, scalar_prefetch = 0 : i64, scratch_operands = 0 : i64, tpu.core_type = #tpu.core_type<tc>, window_params = [{transform_indices = @transform_0, window_bounds = array<i64: 2, 8, 32>}, {transform_indices = @transform_1, window_bounds = array<i64: 2, 16>}, {transform_indices = @transform_2, window_bounds = array<i64: 2, 8>}, {pipeline_mode = #tpu.pipeline_mode<synchronous>, transform_indices = @transform_3, window_bounds = array<i64: 16, 32>}, {pipeline_mode = #tpu.pipeline_mode<synchronous>, transform_indices = @transform_4, window_bounds = array<i64: 1, 16>}, {pipeline_mode = #tpu.pipeline_mode<synchronous>, transform_indices = @transform_5, window_bounds = array<i64: 2, 16>}, {pipeline_mode = #tpu.pipeline_mode<synchronous>, transform_indices = @transform_6, window_bounds = array<i64: 2, 1>}, {transform_indices = @transform_7, window_bounds = array<i64: 2, 2, 8>}]} {
    %c0 = arith.constant 0 : index
    %c0_0 = arith.constant 0 : index
    %0 = vector.load %arg2[%c0, %c0_0] : memref<2x16xf32, #tpu.memory_space<vmem>>, vector<2x16xf32>
    %c0_1 = arith.constant 0 : index
    %c0_2 = arith.constant 0 : index
    %1 = vector.load %arg3[%c0_1, %c0_2] : memref<2x8xf32, #tpu.memory_space<vmem>>, vector<2x8xf32>
    %c0_3 = arith.constant 0 : index
    %c0_4 = arith.constant 0 : index
    %2 = vector.load %arg4[%c0_3, %c0_4] : memref<16x32xf32, #tpu.memory_space<vmem>>, vector<16x32xf32>
    %c0_5 = arith.constant 0 : index
    %c0_6 = arith.constant 0 : index
    %3 = vector.load %arg5[%c0_5, %c0_6] : memref<1x16xf32, #tpu.memory_space<vmem>>, vector<1x16xf32>
    %c0_7 = arith.constant 0 : index
    %c0_8 = arith.constant 0 : index
    %4 = vector.load %arg6[%c0_7, %c0_8] : memref<2x16xf32, #tpu.memory_space<vmem>>, vector<2x16xf32>
    %c0_9 = arith.constant 0 : index
    %c0_10 = arith.constant 0 : index
    %5 = vector.load %arg7[%c0_9, %c0_10] : memref<2x1xf32, #tpu.memory_space<vmem>>, vector<2x1xf32>
    %6 = vector.extract_strided_slice %4 {offsets = [0, 0], sizes = [1, 16], strides = [1, 1]} : vector<2x16xf32> to vector<1x16xf32>
    %7 = vector.broadcast %6 : vector<1x16xf32> to vector<2x16xf32>
    %8 = arith.mulf %0, %7 : vector<2x16xf32>
    %9 = vector.extract_strided_slice %4 {offsets = [1, 0], sizes = [1, 16], strides = [1, 1]} : vector<2x16xf32> to vector<1x16xf32>
    %10 = vector.broadcast %9 : vector<1x16xf32> to vector<2x16xf32>
    %11 = arith.mulf %0, %10 : vector<2x16xf32>
    %12 = tpu.concatenate %8, %11 in 0 : vector<2x16xf32>, vector<2x16xf32> -> vector<4x16xf32>
    %cst = arith.constant dense<0.000000e+00> : vector<4x32xf32>
    %13 = tpu.matmul %12, %2, %cst {dimension_numbers = #tpu.dot_dimension_numbers<[1], [0], [0], [1], [0, 0, 1, 1], [], []>} : vector<4x16xf32>, vector<16x32xf32>, vector<4x32xf32> -> vector<4x32xf32>
    %14 = vector.broadcast %3 : vector<1x16xf32> to vector<4x16xf32>
    %15 = arith.mulf %12, %14 : vector<4x16xf32>
    %cst_11 = arith.constant dense<0.000000e+00> : vector<4xf32>
    %16 = vector.multi_reduction <add>, %15, %cst_11 [1] : vector<4x16xf32> to vector<4xf32>
    %17 = vector.shape_cast %16 : vector<4xf32> to vector<4x1xf32>
    %18 = vector.extract_strided_slice %5 {offsets = [0, 0], sizes = [1, 1], strides = [1, 1]} : vector<2x1xf32> to vector<1x1xf32>
    %19 = vector.shape_cast %18 : vector<1x1xf32> to vector<1x1xf32>
    %20 = vector.broadcast %19 : vector<1x1xf32> to vector<2x1xf32>
    %21 = vector.extract_strided_slice %5 {offsets = [1, 0], sizes = [1, 1], strides = [1, 1]} : vector<2x1xf32> to vector<1x1xf32>
    %22 = vector.shape_cast %21 : vector<1x1xf32> to vector<1x1xf32>
    %23 = vector.broadcast %22 : vector<1x1xf32> to vector<2x1xf32>
    %24 = tpu.concatenate %20, %23 in 0 : vector<2x1xf32>, vector<2x1xf32> -> vector<4x1xf32>
    %25 = arith.addf %17, %24 : vector<4x1xf32>
    %c0_12 = arith.constant 0 : index
    %c0_13 = arith.constant 0 : index
    %c0_14 = arith.constant 0 : index
    %26 = vector.load %arg1[%c0_12, %c0_13, %c0_14] : memref<2x8x32xf32, #tpu.memory_space<vmem>>, vector<1x8x32xf32>
    %27 = vector.shape_cast %26 : vector<1x8x32xf32> to vector<8x32xf32>
    %28 = vector.extract_strided_slice %13 {offsets = [0, 0], sizes = [1, 32], strides = [1, 1]} : vector<4x32xf32> to vector<1x32xf32>
    %29 = vector.extract_strided_slice %13 {offsets = [2, 0], sizes = [1, 32], strides = [1, 1]} : vector<4x32xf32> to vector<1x32xf32>
    %30 = tpu.concatenate %28, %29 in 0 : vector<1x32xf32>, vector<1x32xf32> -> vector<2x32xf32>
    %31 = vector.extract_strided_slice %25 {offsets = [0, 0], sizes = [1, 1], strides = [1, 1]} : vector<4x1xf32> to vector<1x1xf32>
    %32 = vector.extract_strided_slice %25 {offsets = [2, 0], sizes = [1, 1], strides = [1, 1]} : vector<4x1xf32> to vector<1x1xf32>
    %33 = tpu.concatenate %31, %32 in 0 : vector<1x1xf32>, vector<1x1xf32> -> vector<2x1xf32>
    %cst_15 = arith.constant dense<0.000000e+00> : vector<2x8xf32>
    %34 = tpu.matmul %30, %27, %cst_15 {dimension_numbers = #tpu.dot_dimension_numbers<[1], [1], [0], [0], [0, 0, 1, 0], [], []>} : vector<2x32xf32>, vector<8x32xf32>, vector<2x8xf32> -> vector<2x8xf32>
    %35 = vector.broadcast %33 : vector<2x1xf32> to vector<2x8xf32>
    %36 = arith.addf %34, %35 : vector<2x8xf32>
    %37 = vector.extract_strided_slice %1 {offsets = [0, 0], sizes = [1, 8], strides = [1, 1]} : vector<2x8xf32> to vector<1x8xf32>
    %cst_16 = arith.constant 0.000000e+00 : f32
    %38 = vector.broadcast %cst_16 : f32 to vector<1x8xf32>
    %39 = arith.cmpf oeq, %37, %38 : vector<1x8xf32>
    %cst_17 = arith.constant -1.000000e+05 : f32
    %40 = vector.shape_cast %39 : vector<1x8xi1> to vector<1x8xi1>
    %41 = vector.broadcast %40 : vector<1x8xi1> to vector<2x8xi1>
    %42 = vector.broadcast %cst_17 : f32 to vector<2x8xf32>
    %43 = arith.select %41, %42, %36 : vector<2x8xi1>, vector<2x8xf32>
    %c0_18 = arith.constant 0 : index
    %c0_19 = arith.constant 0 : index
    %c0_20 = arith.constant 0 : index
    %44 = vector.load %arg8[%c0_18, %c0_19, %c0_20] : memref<2x2x8xf32, #tpu.memory_space<vmem>>, vector<1x2x8xf32>
    %45 = vector.shape_cast %44 : vector<1x2x8xf32> to vector<2x8xf32>
    %46 = vector.shape_cast %43 : vector<2x8xf32> to vector<1x2x8xf32>
    tpu.vector_store %arg8[%c0_18, %c0_19, %c0_20], %46 {strides = array<i32>} : memref<2x2x8xf32, #tpu.memory_space<vmem>>, vector<1x2x8xf32>,
    %c1 = arith.constant 1 : index
    %c0_21 = arith.constant 0 : index
    %c0_22 = arith.constant 0 : index
    %47 = vector.load %arg1[%c1, %c0_21, %c0_22] : memref<2x8x32xf32, #tpu.memory_space<vmem>>, vector<1x8x32xf32>
    %48 = vector.shape_cast %47 : vector<1x8x32xf32> to vector<8x32xf32>
    %49 = vector.extract_strided_slice %13 {offsets = [1, 0], sizes = [1, 32], strides = [1, 1]} : vector<4x32xf32> to vector<1x32xf32>
    %50 = vector.extract_strided_slice %13 {offsets = [3, 0], sizes = [1, 32], strides = [1, 1]} : vector<4x32xf32> to vector<1x32xf32>
    %51 = tpu.concatenate %49, %50 in 0 : vector<1x32xf32>, vector<1x32xf32> -> vector<2x32xf32>
    %52 = vector.extract_strided_slice %25 {offsets = [1, 0], sizes = [1, 1], strides = [1, 1]} : vector<4x1xf32> to vector<1x1xf32>
    %53 = vector.extract_strided_slice %25 {offsets = [3, 0], sizes = [1, 1], strides = [1, 1]} : vector<4x1xf32> to vector<1x1xf32>
    %54 = tpu.concatenate %52, %53 in 0 : vector<1x1xf32>, vector<1x1xf32> -> vector<2x1xf32>
    %cst_23 = arith.constant dense<0.000000e+00> : vector<2x8xf32>
    %55 = tpu.matmul %51, %48, %cst_23 {dimension_numbers = #tpu.dot_dimension_numbers<[1], [1], [0], [0], [0, 0, 1, 0], [], []>} : vector<2x32xf32>, vector<8x32xf32>, vector<2x8xf32> -> vector<2x8xf32>
    %56 = vector.broadcast %54 : vector<2x1xf32> to vector<2x8xf32>
    %57 = arith.addf %55, %56 : vector<2x8xf32>
    %58 = vector.extract_strided_slice %1 {offsets = [1, 0], sizes = [1, 8], strides = [1, 1]} : vector<2x8xf32> to vector<1x8xf32>
    %cst_24 = arith.constant 0.000000e+00 : f32
    %59 = vector.broadcast %cst_24 : f32 to vector<1x8xf32>
    %60 = arith.cmpf oeq, %58, %59 : vector<1x8xf32>
    %cst_25 = arith.constant -1.000000e+05 : f32
    %61 = vector.shape_cast %60 : vector<1x8xi1> to vector<1x8xi1>
    %62 = vector.broadcast %61 : vector<1x8xi1> to vector<2x8xi1>
    %63 = vector.broadcast %cst_25 : f32 to vector<2x8xf32>
    %64 = arith.select %62, %63, %57 : vector<2x8xi1>, vector<2x8xf32>
    %c1_26 = arith.constant 1 : index
    %c0_27 = arith.constant 0 : index
    %c0_28 = arith.constant 0 : index
    %65 = vector.load %arg8[%c1_26, %c0_27, %c0_28] : memref<2x2x8xf32, #tpu.memory_space<vmem>>, vector<1x2x8xf32>
    %66 = vector.shape_cast %65 : vector<1x2x8xf32> to vector<2x8xf32>
    %67 = vector.shape_cast %64 : vector<2x8xf32> to vector<1x2x8xf32>
    tpu.vector_store %arg8[%c1_26, %c0_27, %c0_28], %67 {strides = array<i32>} : memref<2x2x8xf32, #tpu.memory_space<vmem>>, vector<1x2x8xf32>,
    return
  }
  func.func @transform_0(%arg0: i32) -> (i32, i32, i32) {
    %c0_i32 = arith.constant 0 : i32
    %c0_i32_0 = arith.constant 0 : i32
    %c0_i32_1 = arith.constant 0 : i32
    return %arg0, %c0_i32, %c0_i32_0 : i32, i32, i32
  }
  func.func @transform_1(%arg0: i32) -> (i32, i32) {
    %c0_i32 = arith.constant 0 : i32
    %c0_i32_0 = arith.constant 0 : i32
    return %arg0, %c0_i32 : i32, i32
  }
  func.func @transform_2(%arg0: i32) -> (i32, i32) {
    %c0_i32 = arith.constant 0 : i32
    %c0_i32_0 = arith.constant 0 : i32
    return %arg0, %c0_i32 : i32, i32
  }
  func.func @transform_3(%arg0: i32) -> (i32, i32) {
    %c0_i32 = arith.constant 0 : i32
    %c0_i32_0 = arith.constant 0 : i32
    %c0_i32_1 = arith.constant 0 : i32
    return %c0_i32, %c0_i32_0 : i32, i32
  }
  func.func @transform_4(%arg0: i32) -> (i32, i32) {
    %c0_i32 = arith.constant 0 : i32
    %c0_i32_0 = arith.constant 0 : i32
    %c0_i32_1 = arith.constant 0 : i32
    return %c0_i32, %c0_i32_0 : i32, i32
  }
  func.func @transform_5(%arg0: i32) -> (i32, i32) {
    %c0_i32 = arith.constant 0 : i32
    %c0_i32_0 = arith.constant 0 : i32
    %c0_i32_1 = arith.constant 0 : i32
    return %c0_i32, %c0_i32_0 : i32, i32
  }
  func.func @transform_6(%arg0: i32) -> (i32, i32) {
    %c0_i32 = arith.constant 0 : i32
    %c0_i32_0 = arith.constant 0 : i32
    %c0_i32_1 = arith.constant 0 : i32
    return %c0_i32, %c0_i32_0 : i32, i32
  }
  func.func @transform_7(%arg0: i32) -> (i32, i32, i32) {
    %c0_i32 = arith.constant 0 : i32
    %c0_i32_0 = arith.constant 0 : i32
    %c0_i32_1 = arith.constant 0 : i32
    return %arg0, %c0_i32, %c0_i32_0 : i32, i32, i32
  }
}

</mosaic_0001>

<llo_original>
// kernel: tpu_custom_call.1
$region0: #{tpu_custom_call.1}
  #allocation0 [shape = 'u32[]', space=smem, size = 0x4, offset = 0x4, fixed_abs, tag = 'smem constant byte address 0x4 - core index']
  #allocation1 [shape = 'u32[144,128]{1,0:T(1,128)}', space=vmem, size = 0x12000, scoped, tag = 'internal scratch']
  %s0 = inlined_call_operand.hbm [shape: f32[2,8,32], index: 0, kind: input, shape index: {}]
  %s1 = inlined_call_operand.vmem [shape: f32[2,16], index: 1, kind: input, shape index: {}]
  %s2 = inlined_call_operand.vmem [shape: f32[2,8], index: 2, kind: input, shape index: {}]
  %s3 = inlined_call_operand.hbm [shape: f32[16,32], index: 3, kind: input, shape index: {}]
  %s4 = inlined_call_operand.vmem [shape: f32[1,16], index: 4, kind: input, shape index: {}]
  %s5 = inlined_call_operand.vmem [shape: f32[2,16], index: 5, kind: input, shape index: {}]
  %s6 = inlined_call_operand.vmem [shape: f32[2,1], index: 6, kind: input, shape index: {}]
  %s7 = inlined_call_operand.hbm [shape: f32[2,2,8], index: 7, kind: output, shape index: {}]
  %s8 = sld [smem:[#allocation0]]
  $region46: #{tpu_custom_call.1} parent=0
    _
  %s10 = ssub.s32 1, %s8
  %s11 = scalar_select 0, %s10, %s8
  $region1: #{tpu_custom_call.1} parent=0
    #allocation2 [shape = 'u8[8192]{0}', space=vmem, size = 0x2000, scoped, tag = 'input window, operand 0, single buffered']
    #allocation3 [shape = 's32[1]{0}', space=sflag, size = 0x4, scoped, tag = 'scoped memory for tpu_custom_call.1']
    #allocation4 [shape = 's32[1]{0}', space=sflag, size = 0x4, scoped, tag = 'scoped memory for tpu_custom_call.1']
    #allocation5 [shape = 'u8[8192]{0}', space=vmem, size = 0x2000, scoped, tag = 'input window, operand 3, single buffered']
    #allocation6 [shape = 's32[1]{0}', space=sflag, size = 0x4, scoped, tag = 'scoped memory for tpu_custom_call.1']
    #allocation7 [shape = 'u8[2048]{0}', space=vmem, size = 0x800, scoped, tag = 'output window, operand 0, single buffered']
    %12 = vsyncpa [#allocation3], 0
    %13 = vsyncpa [#allocation6], 0
    %14 = vsyncpa [#allocation4], 0
    // Predicated region
    $region2: #{tpu_custom_call.1} parent=1 // pred_check
      _
    $region3: #{tpu_custom_call.1} parent=1 // pred_check_branch
      %16 = sbr.rel (0) target = $region5
    $region4: #{tpu_custom_call.1} parent=1 // pred_region
      %s18 = ssub.s32 256, 256
      %19 = vsyncadd [#allocation3], %s18
      %s20 = sshll.u32 [#allocation2], 4
      %s21 = int_to_ptr.vmem [resolvable:$true] %s20
      %26 = dma.hbm_to_vmem [thread:$0]  %s0, 256, %s21, [#allocation3], 128, 128, 8
    $region5: #{tpu_custom_call.1} parent=1 // pred_fallthru
      _
    // Predicated region
    $region6: #{tpu_custom_call.1} parent=1 // pred_check
      _
    $region7: #{tpu_custom_call.1} parent=1 // pred_check_branch
      %28 = sbr.rel (0) target = $region9
    $region8: #{tpu_custom_call.1} parent=1 // pred_region
      _
    $region9: #{tpu_custom_call.1} parent=1 // pred_fallthru
      _
    // Predicated region
    $region10: #{tpu_custom_call.1} parent=1 // pred_check
      _
    $region11: #{tpu_custom_call.1} parent=1 // pred_check_branch
      %30 = sbr.rel (0) target = $region13
    $region12: #{tpu_custom_call.1} parent=1 // pred_region
      _
    $region13: #{tpu_custom_call.1} parent=1 // pred_fallthru
      _
    // Predicated region
    $region14: #{tpu_custom_call.1} parent=1 // pred_check
      _
    $region15: #{tpu_custom_call.1} parent=1 // pred_check_branch
      %32 = sbr.rel (0) target = $region17
    $region16: #{tpu_custom_call.1} parent=1 // pred_region
      %s34 = ssub.s32 256, 256
      %35 = vsyncadd [#allocation6], %s34
      %s36 = sshll.u32 [#allocation5], 4
      %s37 = int_to_ptr.vmem [resolvable:$true] %s36
      %42 = dma.hbm_to_vmem [thread:$0]  %s3, 256, %s37, [#allocation6], 128, 128, 8
    $region17: #{tpu_custom_call.1} parent=1 // pred_fallthru
      _
    // Predicated region
    $region18: #{tpu_custom_call.1} parent=1 // pred_check
      _
    $region19: #{tpu_custom_call.1} parent=1 // pred_check_branch
      %44 = sbr.rel (0) target = $region21
    $region20: #{tpu_custom_call.1} parent=1 // pred_region
      _
    $region21: #{tpu_custom_call.1} parent=1 // pred_fallthru
      _
    // Predicated region
    $region22: #{tpu_custom_call.1} parent=1 // pred_check
      _
    $region23: #{tpu_custom_call.1} parent=1 // pred_check_branch
      %46 = sbr.rel (0) target = $region25
    $region24: #{tpu_custom_call.1} parent=1 // pred_region
      _
    $region25: #{tpu_custom_call.1} parent=1 // pred_fallthru
      _
    // Predicated region
    $region26: #{tpu_custom_call.1} parent=1 // pred_check
      _
    $region27: #{tpu_custom_call.1} parent=1 // pred_check_branch
      %48 = sbr.rel (0) target = $region29
    $region28: #{tpu_custom_call.1} parent=1 // pred_region
      _
    $region29: #{tpu_custom_call.1} parent=1 // pred_fallthru
      _
    // Predicated region
    $region30: #{tpu_custom_call.1} parent=1 // pred_check
      _
    $region31: #{tpu_custom_call.1} parent=1 // pred_check_branch
      %50 = sbr.rel (0) target = $region33
    $region32: #{tpu_custom_call.1} parent=1 // pred_region
      %51 = dma.done [#allocation3], 256
    $region33: #{tpu_custom_call.1} parent=1 // pred_fallthru
      _
    // Predicated region
    $region34: #{tpu_custom_call.1} parent=1 // pred_check
      _
    $region35: #{tpu_custom_call.1} parent=1 // pred_check_branch
      %53 = sbr.rel (0) target = $region37
    $region36: #{tpu_custom_call.1} parent=1 // pred_region
      %54 = dma.done [#allocation6], 256
    $region37: #{tpu_custom_call.1} parent=1 // pred_fallthru
      _
    %v55 = vld [vmem:[%s1] sm:$0x3]
    %v56 = vld [vmem:[%s2] sm:$0x3]
    %v57 = vld [vmem:[#allocation5] sm:$0xff]
    %v58 = vld [vmem:[#allocation5 + $0x8] sm:$0xff]
    %v59 = vld [vmem:[%s4] sm:$0x1]
    %v60 = vld [vmem:[%s5] sm:$0x3]
    %v61 = vld [vmem:[%s6] sm:$0x3]
    %v62 = vlaneseq
    %v63 = vshrl.u32 %v62, 7
    %v64 = vsub.s32 0, %v63
    %v65 = vrot.slane %v60, %v64
    %v66 = vmul.f32 %v55, %v65
    %v67 = vlaneseq
    %v68 = vshrl.u32 %v67, 7
    %v69 = vsub.s32 1, %v68
    %v70 = vrot.slane %v60, %v69
    %v71 = vmul.f32 %v55, %v70
    %v73 = vrot.slane %v71, 6
    %vm75 = vcmask 1041408
    %v76 = vsel %vm75, %v66, %v73
    %vm77 = vcmask 130048
    %v79 = vsel %vm77, %v76, 0
    %81 = vmatprep.subr.mxu0 0.0
    %82 = vmatpush1.msra.mxu0 0.0
    %83 = vmatprep.subr.mxu0 0.0
    %84 = vmatpush1.msra.mxu0 0.0
    %85 = vmatprep.subr.mxu0 0.0
    %86 = vmatpush1.msra.mxu0 0.0
    %87 = vmatprep.subr.mxu0 0.0
    %88 = vmatpush1.msra.mxu0 0.0
    %89 = vmatprep.subr.mxu0 0.0
    %90 = vmatpush1.msra.mxu0 0.0
    %91 = vmatprep.subr.mxu0 0.0
    %92 = vmatpush1.msra.mxu0 0.0
    %93 = vmatprep.subr.mxu0 0.0
    %94 = vmatpush1.msra.mxu0 0.0
    %95 = vmatprep.subr.mxu0 0.0
    %96 = vmatpush1.msra.mxu0 0.0
    %97 = vmatprep.subr.mxu0 0.0
    %98 = vmatpush1.msra.mxu0 0.0
    %99 = vmatprep.subr.mxu0 0.0
    %100 = vmatpush1.msra.mxu0 0.0
    %101 = vmatprep.subr.mxu0 0.0
    %102 = vmatpush1.msra.mxu0 0.0
    %103 = vmatprep.subr.mxu0 0.0
    %104 = vmatpush1.msra.mxu0 0.0
    %105 = vmatprep.subr.mxu0 0.0
    %106 = vmatpush1.msra.mxu0 0.0
    %107 = vmatprep.subr.mxu0 0.0
    %108 = vmatpush1.msra.mxu0 0.0
    %109 = vmatprep.subr.mxu0 0.0
    %110 = vmatpush1.msra.mxu0 %v58
    %111 = vmatprep.subr.mxu0 0.0
    %112 = vmatpush1.msra.mxu0 %v57
    %113 = vmatprep.subr.mxu0 0.0
    %114 = vmatpush2.msra.mxu0 0.0
    %115 = vmatprep.subr.mxu0 0.0
    %116 = vmatpush2.msra.mxu0 0.0
    %117 = vmatprep.subr.mxu0 0.0
    %118 = vmatpush2.msra.mxu0 0.0
    %119 = vmatprep.subr.mxu0 0.0
    %120 = vmatpush2.msra.mxu0 0.0
    %121 = vmatprep.subr.mxu0 0.0
    %122 = vmatpush2.msra.mxu0 0.0
    %123 = vmatprep.subr.mxu0 0.0
    %124 = vmatpush2.msra.mxu0 0.0
    %125 = vmatprep.subr.mxu0 0.0
    %126 = vmatpush2.msra.mxu0 0.0
    %127 = vmatprep.subr.mxu0 0.0
    %128 = vmatpush2.msra.mxu0 0.0
    %129 = vmatprep.subr.mxu0 0.0
    %130 = vmatpush2.msra.mxu0 0.0
    %131 = vmatprep.subr.mxu0 0.0
    %132 = vmatpush2.msra.mxu0 0.0
    %133 = vmatprep.subr.mxu0 0.0
    %134 = vmatpush2.msra.mxu0 0.0
    %135 = vmatprep.subr.mxu0 0.0
    %136 = vmatpush2.msra.mxu0 0.0
    %137 = vmatprep.subr.mxu0 0.0
    %138 = vmatpush2.msra.mxu0 0.0
    %139 = vmatprep.subr.mxu0 0.0
    %140 = vmatpush2.msra.mxu0 0.0
    %141 = vmatprep.subr.mxu0 0.0
    %142 = vmatpush2.msra.mxu0 0.0
    %143 = vmatprep.subr.mxu0 0.0
    %144 = vmatpush2.msra.mxu0 0.0
    %145 = vmatprep.mubr.f32.mxu0 0.0
    %146 = vmatmul.mubr.f32.gmra.mxu0 %v79
    %v147 = vpop.f32.mrf.mxu0
    %v148 = vadd.f32 0.0, %v147
    %v149 = vpop.f32.mrf.mxu0
    %150 = vdwg.mxu0
    %v152 = vlaneseq
    %v153 = vshrl.u32 %v152, 7
    %v154 = vsub.s32 0, %v153
    %v155 = vrot.slane %v59, %v154
    %v157 = vmul.f32 %v76, %v155
    %vm158 = vcmask 125952
    %v159 = vsel %vm158, %v157, 0.0
    %160 = vadd.xlane.f32.xlu0 %v159
    %v161 = vpop.xlane.xlu0 %160
    %v162 = vlaneseq
    %v163 = vshrl.u32 %v162, 7
    %v164 = vsub.s32 0, %v163
    %v165 = vrot.slane %v61, %v164
    %v166 = vlaneseq
    %v167 = vshrl.u32 %v166, 7
    %v168 = vsub.s32 1, %v167
    %v169 = vrot.slane %v61, %v168
    %v170 = vsel %vm75, %v165, %v169
    %v171 = vadd.f32 %v161, %v170
    %v172 = vld [vmem:[#allocation2] sm:$0xff]
    %v174 = vrot.slane %v148, 1
    %vm176 = vcmask 1040384
    %v177 = vsel %vm176, %v148, %v174
    %v179 = vrot.slane %v171, 1
    %v181 = vsel %vm176, %v171, %v179
    %183 = vset.pattern.permute.xlu0 0
    %184 = vperm.xlu0 %183, %v181
    %v185 = vpop.permute.xlu0 %184
    %vm187 = vcmask 261120
    %v189 = vsel %vm187, %v177, 0
    %v192 = vsel %vm187, %v172, 0
    %194 = vmatprep.subr.mxu0 0.0
    %195 = vmatpush1.xpose.msra.mxu0 0.0
    %196 = vmatprep.subr.mxu0 0.0
    %197 = vmatpush1.xpose.msra.mxu0 0.0
    %198 = vmatprep.subr.mxu0 0.0
    %199 = vmatpush1.xpose.msra.mxu0 0.0
    %200 = vmatprep.subr.mxu0 0.0
    %201 = vmatpush1.xpose.msra.mxu0 0.0
    %202 = vmatprep.subr.mxu0 0.0
    %203 = vmatpush1.xpose.msra.mxu0 0.0
    %204 = vmatprep.subr.mxu0 0.0
    %205 = vmatpush1.xpose.msra.mxu0 0.0
    %206 = vmatprep.subr.mxu0 0.0
    %207 = vmatpush1.xpose.msra.mxu0 0.0
    %208 = vmatprep.subr.mxu0 0.0
    %209 = vmatpush1.xpose.msra.mxu0 0.0
    %210 = vmatprep.subr.mxu0 0.0
    %211 = vmatpush1.xpose.msra.mxu0 0.0
    %212 = vmatprep.subr.mxu0 0.0
    %213 = vmatpush1.xpose.msra.mxu0 0.0
    %214 = vmatprep.subr.mxu0 0.0
    %215 = vmatpush1.xpose.msra.mxu0 0.0
    %216 = vmatprep.subr.mxu0 0.0
    %217 = vmatpush1.xpose.msra.mxu0 0.0
    %218 = vmatprep.subr.mxu0 0.0
    %219 = vmatpush1.xpose.msra.mxu0 0.0
    %220 = vmatprep.subr.mxu0 0.0
    %221 = vmatpush1.xpose.msra.mxu0 0.0
    %222 = vmatprep.subr.mxu0 0.0
    %223 = vmatpush1.xpose.msra.mxu0 0.0
    %224 = vmatprep.subr.mxu0 0.0
    %225 = vmatpush1.xpose.msra.mxu0 %v192
    %226 = vmatprep.subr.mxu0 0.0
    %227 = vmatpush2.xpose.msra.mxu0 0.0
    %228 = vmatprep.subr.mxu0 0.0
    %229 = vmatpush2.xpose.msra.mxu0 0.0
    %230 = vmatprep.subr.mxu0 0.0
    %231 = vmatpush2.xpose.msra.mxu0 0.0
    %232 = vmatprep.subr.mxu0 0.0
    %233 = vmatpush2.xpose.msra.mxu0 0.0
    %234 = vmatprep.subr.mxu0 0.0
    %235 = vmatpush2.xpose.msra.mxu0 0.0
    %236 = vmatprep.subr.mxu0 0.0
    %237 = vmatpush2.xpose.msra.mxu0 0.0
    %238 = vmatprep.subr.mxu0 0.0
    %239 = vmatpush2.xpose.msra.mxu0 0.0
    %240 = vmatprep.subr.mxu0 0.0
    %241 = vmatpush2.xpose.msra.mxu0 0.0
    %242 = vmatprep.subr.mxu0 0.0
    %243 = vmatpush2.xpose.msra.mxu0 0.0
    %244 = vmatprep.subr.mxu0 0.0
    %245 = vmatpush2.xpose.msra.mxu0 0.0
    %246 = vmatprep.subr.mxu0 0.0
    %247 = vmatpush2.xpose.msra.mxu0 0.0
    %248 = vmatprep.subr.mxu0 0.0
    %249 = vmatpush2.xpose.msra.mxu0 0.0
    %250 = vmatprep.subr.mxu0 0.0
    %251 = vmatpush2.xpose.msra.mxu0 0.0
    %252 = vmatprep.subr.mxu0 0.0
    %253 = vmatpush2.xpose.msra.mxu0 0.0
    %254 = vmatprep.subr.mxu0 0.0
    %255 = vmatpush2.xpose.msra.mxu0 0.0
    %256 = vmatprep.subr.mxu0 0.0
    %257 = vmatpush2.xpose.msra.mxu0 0.0
    %258 = vmatprep.mubr.f32.mxu0 0.0
    %259 = vmatmul.mubr.f32.gmra.mxu0 %v189
    %v260 = vpop.f32.mrf.mxu0
    %v261 = vadd.f32 %v185, %v260
    %v262 = vpop.f32.mrf.mxu0
    %263 = vdwg.mxu0
    %vm264 = vcmp.eq.f32.partialorder %v56, 0.0
    %v265 = vsel %vm264, 1, 0
    %v266 = vlaneseq
    %v267 = vshrl.u32 %v266, 7
    %v268 = vsub.s32 0, %v267
    %v269 = vrot.slane %v265, %v268
    %vm270 = vcmp.eq.s32.totalorder %v269, 1
    %v271 = vsel %vm270, -100000.0, %v261
    %vm272 = vcmask 58368
    %273 = vst.msk [vmem:[#allocation7] sm:$0x3] %vm272, %v271
    %s274 = scalar_lea.vmem [#allocation2], 8
    %v275 = vld [vmem:[%s274] sm:$0xff]
    %v276 = vrot.slane %v148, 2
    %v278 = vsel %vm176, %v174, %v276
    %v279 = vrot.slane %v171, 2
    %v281 = vsel %vm176, %v179, %v279
    %283 = vset.pattern.permute.xlu0 0
    %284 = vperm.xlu0 %283, %v281
    %v285 = vpop.permute.xlu0 %284
    %v288 = vsel %vm187, %v278, 0
    %v291 = vsel %vm187, %v275, 0
    %293 = vmatprep.subr.mxu0 0.0
    %294 = vmatpush1.xpose.msra.mxu0 0.0
    %295 = vmatprep.subr.mxu0 0.0
    %296 = vmatpush1.xpose.msra.mxu0 0.0
    %297 = vmatprep.subr.mxu0 0.0
    %298 = vmatpush1.xpose.msra.mxu0 0.0
    %299 = vmatprep.subr.mxu0 0.0
    %300 = vmatpush1.xpose.msra.mxu0 0.0
    %301 = vmatprep.subr.mxu0 0.0
    %302 = vmatpush1.xpose.msra.mxu0 0.0
    %303 = vmatprep.subr.mxu0 0.0
    %304 = vmatpush1.xpose.msra.mxu0 0.0
    %305 = vmatprep.subr.mxu0 0.0
    %306 = vmatpush1.xpose.msra.mxu0 0.0
    %307 = vmatprep.subr.mxu0 0.0
    %308 = vmatpush1.xpose.msra.mxu0 0.0
    %309 = vmatprep.subr.mxu0 0.0
    %310 = vmatpush1.xpose.msra.mxu0 0.0
    %311 = vmatprep.subr.mxu0 0.0
    %312 = vmatpush1.xpose.msra.mxu0 0.0
    %313 = vmatprep.subr.mxu0 0.0
    %314 = vmatpush1.xpose.msra.mxu0 0.0
    %315 = vmatprep.subr.mxu0 0.0
    %316 = vmatpush1.xpose.msra.mxu0 0.0
    %317 = vmatprep.subr.mxu0 0.0
    %318 = vmatpush1.xpose.msra.mxu0 0.0
    %319 = vmatprep.subr.mxu0 0.0
    %320 = vmatpush1.xpose.msra.mxu0 0.0
    %321 = vmatprep.subr.mxu0 0.0
    %322 = vmatpush1.xpose.msra.mxu0 0.0
    %323 = vmatprep.subr.mxu0 0.0
    %324 = vmatpush1.xpose.msra.mxu0 %v291
    %325 = vmatprep.subr.mxu0 0.0
    %326 = vmatpush2.xpose.msra.mxu0 0.0
    %327 = vmatprep.subr.mxu0 0.0
    %328 = vmatpush2.xpose.msra.mxu0 0.0
    %329 = vmatprep.subr.mxu0 0.0
    %330 = vmatpush2.xpose.msra.mxu0 0.0
    %331 = vmatprep.subr.mxu0 0.0
    %332 = vmatpush2.xpose.msra.mxu0 0.0
    %333 = vmatprep.subr.mxu0 0.0
    %334 = vmatpush2.xpose.msra.mxu0 0.0
    %335 = vmatprep.subr.mxu0 0.0
    %336 = vmatpush2.xpose.msra.mxu0 0.0
    %337 = vmatprep.subr.mxu0 0.0
    %338 = vmatpush2.xpose.msra.mxu0 0.0
    %339 = vmatprep.subr.mxu0 0.0
    %340 = vmatpush2.xpose.msra.mxu0 0.0
    %341 = vmatprep.subr.mxu0 0.0
    %342 = vmatpush2.xpose.msra.mxu0 0.0
    %343 = vmatprep.subr.mxu0 0.0
    %344 = vmatpush2.xpose.msra.mxu0 0.0
    %345 = vmatprep.subr.mxu0 0.0
    %346 = vmatpush2.xpose.msra.mxu0 0.0
    %347 = vmatprep.subr.mxu0 0.0
    %348 = vmatpush2.xpose.msra.mxu0 0.0
    %349 = vmatprep.subr.mxu0 0.0
    %350 = vmatpush2.xpose.msra.mxu0 0.0
    %351 = vmatprep.subr.mxu0 0.0
    %352 = vmatpush2.xpose.msra.mxu0 0.0
    %353 = vmatprep.subr.mxu0 0.0
    %354 = vmatpush2.xpose.msra.mxu0 0.0
    %355 = vmatprep.subr.mxu0 0.0
    %356 = vmatpush2.xpose.msra.mxu0 0.0
    %357 = vmatprep.mubr.f32.mxu0 0.0
    %358 = vmatmul.mubr.f32.gmra.mxu0 %v288
    %v359 = vpop.f32.mrf.mxu0
    %v360 = vadd.f32 %v285, %v359
    %v361 = vpop.f32.mrf.mxu0
    %362 = vdwg.mxu0
    %v363 = vlaneseq
    %v364 = vshrl.u32 %v363, 7
    %v365 = vsub.s32 1, %v364
    %v366 = vrot.slane %v265, %v365
    %vm367 = vcmp.eq.s32.totalorder %v366, 1
    %v368 = vsel %vm367, -100000.0, %v360
    %s369 = scalar_lea.vmem [#allocation7], 2
    %370 = vst.msk [vmem:[%s369] sm:$0x3] %vm272, %v368
    // Predicated region
    $region38: #{tpu_custom_call.1} parent=1 // pred_check
      _
    $region39: #{tpu_custom_call.1} parent=1 // pred_check_branch
      %372 = sbr.rel (0) target = $region41
    $region40: #{tpu_custom_call.1} parent=1 // pred_region
      %s374 = ssub.s32 64, 64
      %375 = vsyncadd [#allocation4], %s374
      %s376 = sshll.u32 [#allocation7], 4
      %s377 = int_to_ptr.vmem [resolvable:$true] %s376
      %382 = dma.vmem_to_hbm [thread:$0]  %s377, 64, %s7, [#allocation4], 32, 32, 2
    $region41: #{tpu_custom_call.1} parent=1 // pred_fallthru
      _
    // Predicated region
    $region42: #{tpu_custom_call.1} parent=1 // pred_check
      _
    $region43: #{tpu_custom_call.1} parent=1 // pred_check_branch
      %384 = sbr.rel (0) target = $region45
    $region44: #{tpu_custom_call.1} parent=1 // pred_region
      %385 = dma.done [#allocation4], 64
    $region45: #{tpu_custom_call.1} parent=1 // pred_fallthru
      _
    %386 = vsyncpa [#allocation3], 1
    %387 = vsyncpa [#allocation6], 1
    %388 = vsyncpa [#allocation4], 1

</llo_original>
